<compile_context>
chip_gen: v6e
topology: v6e:2x2x1
jax: 0.10.0
libtpu: 0.0.40
codegen_flags: <defaults>
</compile_context>

<pallas_src>
import functools

import jax
import jax.numpy as jnp
from jax.experimental import pallas as pl
from jax.experimental.pallas import tpu as pltpu

LANES = 128
SUBLANES = 8


def _cdiv(a: int, b: int) -> int:
    return -(-a // b)


def _focal_power(one_minus_pt, gamma):
    """(1 - pt) ** gamma; small integer gamma lowers to multiplies (no EUP exp/log pair)."""
    g_int = int(gamma)
    if float(gamma) == float(g_int) and 0 <= g_int <= 8:
        if g_int == 0:
            return jnp.ones_like(one_minus_pt)
        w = one_minus_pt
        for _ in range(g_int - 1):
            w = w * one_minus_pt
        return w
    return one_minus_pt ** jnp.float32(gamma)


def _focal_elementwise(x, t, gamma):
    """Per-element focal BCE-with-logits in f32 (plain-jnp path for tiny tails)."""
    x = x.astype(jnp.float32)
    t = t.astype(jnp.float32)
    bce = jnp.maximum(x, 0.0) - x * t + jnp.log1p(jnp.exp(-jnp.abs(x)))
    pt = jnp.exp(-bce)
    return _focal_power(1.0 - pt, gamma) * bce


def _num_tensorcores() -> int:
    """TensorCores per Pallas device (megacore split width), from the device kind."""
    try:
        kind = jax.devices()[0].device_kind.lower()
    except Exception:
        return 1
    # v4 / v5p (megacore) and v7x expose 2 TensorCores per device; v2/v3 map one core
    # per JAX device and v5e / v6e have a single TensorCore.
    if "v7" in kind or "v4" in kind or "v5p" in kind:
        return 2
    return 1


def _focal_sum_kernel(x_ref, t_ref, out_ref, *, gamma, tile_rows, tiles_per_par,
                      n_blocks, valid_rows_last, mask_last, skip_dups):
    """Sum focal BCE-with-logits over one (tile_rows, 128) tile into the resident
    (8, 128) f32 partial-sum block owned by this core / parallel slice."""
    c = pl.program_id(0)          # parallel (core) axis
    i = pl.program_id(1)          # reduction axis over this core's tiles

    @pl.when(i == 0)
    def _():
        out_ref[...] = jnp.zeros_like(out_ref)

    tile_id = c * tiles_per_par + i

    def _accumulate():
        x = x_ref[...].astype(jnp.float32)
        t = t_ref[...].astype(jnp.float32)
        # Numerically stable BCE with logits: relu(x) - x*t + log1p(exp(-|x|)).
        bce = jnp.maximum(x, 0.0) - x * t + jnp.log1p(jnp.exp(-jnp.abs(x)))
        # pt = exp(-bce): single EUP exp, matches the reference formula exactly.
        pt = jnp.exp(-bce)
        focal = _focal_power(1.0 - pt, gamma) * bce

        def _fold_add(f):
            # Fold the tile to (8, 128) with plain VALU adds (groups whole native
            # (8,128) tiles, no cross-lane movement) and accumulate in place.
            out_ref[...] += f.reshape(tile_rows // SUBLANES, SUBLANES, LANES).sum(axis=0)

        if mask_last:
            is_last = tile_id == (n_blocks - 1)

            @pl.when(jnp.logical_not(is_last))
            def _():
                _fold_add(focal)          # interior tiles: no mask work at all

            @pl.when(is_last)
            def _():
                # Overhang rows of the final partial block hold undefined VMEM data;
                # use a select (never multiply-by-mask) so NaN/Inf there are dropped.
                row_in = jax.lax.broadcasted_iota(jnp.int32, focal.shape, 0)
                _fold_add(jnp.where(row_in < valid_rows_last, focal, 0.0))
        else:
            _fold_add(focal)

    if skip_dups:
        # Uneven core split: clamped duplicate tiles contribute nothing (their DMA is
        # already elided because the clamped block index repeats the previous step's).
        pl.when(tile_id < n_blocks)(_accumulate)
    else:
        _accumulate()


def focal_with_logits_loss(predicted, target, weight=None, gamma=2.0,
                           reduction="mean", tile_rows=None):
    """JAX/Pallas equivalent of FocalWithLogitsLoss(weight=None).forward."""
    if weight is not None:
        # TODO(synk): per-class `weight` tensor not supported in this kernel.
        raise NotImplementedError("weight is not supported")
    if reduction not in ("mean", "sum"):
        # TODO(synk): reduction='none' (per-element output) not exposed by this kernel.
        raise NotImplementedError("reduction='none' not supported in this kernel")
    assert predicted.shape == target.shape

    n_elems = predicted.size
    if n_elems == 0:
        return jnp.float32(0.0) if reduction == "sum" else jnp.float32(jnp.nan)

    flat_x = predicted.reshape(-1)     # contiguous row-major reshape: free
    flat_t = target.reshape(-1)

    item_x = jnp.dtype(predicted.dtype).itemsize
    item_t = jnp.dtype(target.dtype).itemsize
    # Sublane alignment for the narrowest input dtype (8 for 32-bit, 16 for 16-bit, ...).
    align = max(SUBLANES,
                SUBLANES * max(1, 4 // item_x),
                SUBLANES * max(1, 4 // item_t))

    rows = n_elems // LANES
    total = jnp.float32(0.0)
    handled = 0

    if rows >= align:
        if tile_rows is None:
            # >= ~1 MiB per-input DMA per grid step (amortizes ~0.35 us step overhead).
            tile_rows = 4096 if min(item_x, item_t) <= 2 else 2048
        tr = max(align, (min(int(tile_rows), rows) // align) * align)

        n_main = rows * LANES
        if n_main != n_elems:
            # 128-aligned prefix only; the <128-element lane remainder is reduced with
            # plain jnp below instead of padding/copying the whole tensors.
            x_main = flat_x[:n_main]
            t_main = flat_t[:n_main]
        else:
            x_main, t_main = flat_x, flat_t
        x2 = x_main.reshape(rows, LANES)
        t2 = t_main.reshape(rows, LANES)

        n_blocks = _cdiv(rows, tr)
        n_par = max(1, min(_num_tensorcores(), n_blocks))
        tiles_per_par = _cdiv(n_blocks, n_par)
        skip_dups = n_par * tiles_per_par > n_blocks
        mask_last = (rows % tr) != 0
        valid_rows_last = rows - (n_blocks - 1) * tr

        if n_par == 1:
            def in_index_map(c, i):
                return (i, 0)
        elif skip_dups:
            def in_index_map(c, i):
                # Clamp so duplicate iterations of an uneven split point at the last
                # real block; their compute is skipped in-kernel.
                return (jnp.minimum(c * tiles_per_par + i, n_blocks - 1), 0)
        else:
            def in_index_map(c, i):
                return (c * tiles_per_par + i, 0)

        in_spec = pl.BlockSpec((tr, LANES), in_index_map)

        kernel = functools.partial(
            _focal_sum_kernel, gamma=gamma, tile_rows=tr,
            tiles_per_par=tiles_per_par, n_blocks=n_blocks,
            valid_rows_last=valid_rows_last, mask_last=mask_last,
            skip_dups=skip_dups)

        cost = pl.CostEstimate(
            flops=12 * n_main,
            transcendentals=3 * n_main,
            bytes_accessed=n_main * (item_x + item_t) + n_par * SUBLANES * LANES * 4)

        partial_sums = pl.pallas_call(
            kernel,
            out_shape=jax.ShapeDtypeStruct((n_par * SUBLANES, LANES), jnp.float32),
            grid_spec=pltpu.PrefetchScalarGridSpec(
                num_scalar_prefetch=0,
                grid=(n_par, tiles_per_par),
                in_specs=[in_spec, in_spec],
                out_specs=pl.BlockSpec((SUBLANES, LANES), lambda c, i: (c, 0)),
            ),
            compiler_params=pltpu.CompilerParams(
                dimension_semantics=("parallel", "arbitrary")),
            cost_estimate=cost,
        )(x2, t2)

        # Single small cross-lane reduce of the (n_par*8, 128) partial sums.
        total = total + jnp.sum(partial_sums, dtype=jnp.float32)
        handled = n_main

    if handled < n_elems:
        # Tiny tail (< align*128 elements): plain-jnp reduction in the wrapper.
        total = total + jnp.sum(
            _focal_elementwise(flat_x[handled:], flat_t[handled:], gamma),
            dtype=jnp.float32)

    if reduction == "mean":
        return total / jnp.float32(n_elems)
    return total


def _reference(predicted, target, gamma=2.0):
    x = predicted.astype(jnp.float32)
    t = target.astype(jnp.float32)
    bce = jnp.maximum(x, 0.0) - x * t + jnp.log1p(jnp.exp(-jnp.abs(x)))
    pt = jnp.exp(-bce)
    return jnp.mean((1.0 - pt) ** jnp.float32(gamma) * bce)


if __name__ == "__main__":
    key = jax.random.PRNGKey(0)
    k1, k2, k3, k4 = jax.random.split(key, 4)

    # NCHW input shapes, as a segmentation-style focal loss would see them.
    B, C, H, W = 2, 4, 16, 16
    predicted = jax.random.normal(k1, (B, C, H, W), dtype=jnp.float32) * 2.0
    target = (jax.random.uniform(k2, (B, C, H, W)) > 0.5).astype(jnp.float32)

    loss = focal_with_logits_loss(predicted, target, gamma=2, reduction="mean")
    loss = jax.block_until_ready(loss)
    ref = _reference(predicted, target, gamma=2.0)
    assert jnp.allclose(loss, ref, rtol=1e-5, atol=1e-6), (loss, ref)

    # Ragged shape: exercises the partial-block mask and the lane-remainder path.
    p2 = jax.random.normal(k3, (3, 5, 7, 11), dtype=jnp.float32) * 2.0
    t2 = (jax.random.uniform(k4, (3, 5, 7, 11)) > 0.5).astype(jnp.float32)
    loss2 = jax.block_until_ready(
        focal_with_logits_loss(p2, t2, gamma=2, reduction="mean"))
    ref2 = _reference(p2, t2, gamma=2.0)
    assert jnp.allclose(loss2, ref2, rtol=1e-5, atol=1e-6), (loss2, ref2)

    print("KERNEL_OK")
</pallas_src>

<mosaic_0001>
module attributes {stable_mosaic.version = 11 : i64} {
  func.func @_focal_sum_kernel(%arg0: i32, %arg1: i32, %arg2: memref<16x128xf32, #tpu.memory_space<vmem>>, %arg3: memref<16x128xf32, #tpu.memory_space<vmem>>, %arg4: memref<8x128xf32, #tpu.memory_space<vmem>>) attributes {dimension_semantics = [#tpu.dimension_semantics<parallel>, #tpu.dimension_semantics<arbitrary>], iteration_bounds = array<i64: 1, 1>, scalar_prefetch = 0 : i64, scratch_operands = 0 : i64, tpu.core_type = #tpu.core_type<tc>, window_params = [{transform_indices = @transform_0, window_bounds = array<i64: 16, 128>}, {transform_indices = @transform_1, window_bounds = array<i64: 16, 128>}, {transform_indices = @transform_2, window_bounds = array<i64: 8, 128>}]} {
    %c0_i32 = arith.constant 0 : i32
    %0 = arith.cmpi eq, %arg1, %c0_i32 : i32
    %1 = arith.extui %0 : i1 to i32
    %c0_i32_0 = arith.constant 0 : i32
    %2 = arith.cmpi ne, %1, %c0_i32_0 : i32
    scf.if %2 {
      %cst_12 = arith.constant 0.000000e+00 : f32
      %27 = vector.broadcast %cst_12 : f32 to vector<8x128xf32>
      %c0_13 = arith.constant 0 : index
      %c0_14 = arith.constant 0 : index
      %28 = vector.load %arg4[%c0_13, %c0_14] : memref<8x128xf32, #tpu.memory_space<vmem>>, vector<8x128xf32>
      tpu.vector_store %arg4[%c0_13, %c0_14], %27 {strides = array<i32>} : memref<8x128xf32, #tpu.memory_space<vmem>>, vector<8x128xf32>,
    } else {
    }
    %c0 = arith.constant 0 : index
    %c0_1 = arith.constant 0 : index
    %3 = vector.load %arg2[%c0, %c0_1] : memref<16x128xf32, #tpu.memory_space<vmem>>, vector<16x128xf32>
    %c0_2 = arith.constant 0 : index
    %c0_3 = arith.constant 0 : index
    %4 = vector.load %arg3[%c0_2, %c0_3] : memref<16x128xf32, #tpu.memory_space<vmem>>, vector<16x128xf32>
    %cst = arith.constant 0.000000e+00 : f32
    %5 = vector.broadcast %cst : f32 to vector<16x128xf32>
    %6 = arith.maximumf %3, %5 : vector<16x128xf32>
    %7 = arith.mulf %3, %4 : vector<16x128xf32>
    %8 = arith.subf %6, %7 : vector<16x128xf32>
    %9 = math.absf %3 : vector<16x128xf32>
    %cst_4 = arith.constant 0.000000e+00 : f32
    %10 = vector.broadcast %cst_4 : f32 to vector<16x128xf32>
    %11 = arith.subf %10, %9 : vector<16x128xf32>
    %12 = math.exp %11 : vector<16x128xf32>
    %13 = math.log1p %12 : vector<16x128xf32>
    %14 = arith.addf %8, %13 : vector<16x128xf32>
    %cst_5 = arith.constant 0.000000e+00 : f32
    %15 = vector.broadcast %cst_5 : f32 to vector<16x128xf32>
    %16 = arith.subf %15, %14 : vector<16x128xf32>
    %17 = math.exp %16 : vector<16x128xf32>
    %cst_6 = arith.constant 1.000000e+00 : f32
    %18 = vector.broadcast %cst_6 : f32 to vector<16x128xf32>
    %19 = arith.subf %18, %17 : vector<16x128xf32>
    %20 = arith.mulf %19, %19 : vector<16x128xf32>
    %21 = arith.mulf %20, %14 : vector<16x128xf32>
    %c0_7 = arith.constant 0 : index
    %c0_8 = arith.constant 0 : index
    %22 = vector.load %arg4[%c0_7, %c0_8] : memref<8x128xf32, #tpu.memory_space<vmem>>, vector<8x128xf32>
    %23 = vector.shape_cast %21 : vector<16x128xf32> to vector<2x8x128xf32>
    %cst_9 = arith.constant dense<0.000000e+00> : vector<8x128xf32>
    %24 = vector.multi_reduction <add>, %23, %cst_9 [0] : vector<2x8x128xf32> to vector<8x128xf32>
    %25 = arith.addf %22, %24 : vector<8x128xf32>
    %c0_10 = arith.constant 0 : index
    %c0_11 = arith.constant 0 : index
    %26 = vector.load %arg4[%c0_10, %c0_11] : memref<8x128xf32, #tpu.memory_space<vmem>>, vector<8x128xf32>
    tpu.vector_store %arg4[%c0_10, %c0_11], %25 {strides = array<i32>} : memref<8x128xf32, #tpu.memory_space<vmem>>, vector<8x128xf32>,
    return
  }
  func.func @transform_0(%arg0: i32, %arg1: i32) -> (i32, i32) {
    %c0_i32 = arith.constant 0 : i32
    %c0_i32_0 = arith.constant 0 : i32
    return %arg1, %c0_i32 : i32, i32
  }
  func.func @transform_1(%arg0: i32, %arg1: i32) -> (i32, i32) {
    %c0_i32 = arith.constant 0 : i32
    %c0_i32_0 = arith.constant 0 : i32
    return %arg1, %c0_i32 : i32, i32
  }
  func.func @transform_2(%arg0: i32, %arg1: i32) -> (i32, i32) {
    %c0_i32 = arith.constant 0 : i32
    %c0_i32_0 = arith.constant 0 : i32
    return %arg0, %c0_i32 : i32, i32
  }
}

</mosaic_0001>

<llo_original>
// kernel: tpu_custom_call.1
$region0: #{tpu_custom_call.1}
  #allocation0 [shape = 'u32[]', space=smem, size = 0x4, offset = 0x4, fixed_abs, tag = 'smem constant byte address 0x4 - core index']
  #allocation1 [shape = 'u32[144,128]{1,0:T(1,128)}', space=vmem, size = 0x12000, scoped, tag = 'internal scratch']
  %s0 = inlined_call_operand.hbm [shape: f32[16,128], index: 0, kind: input, shape index: {}]
  %s1 = inlined_call_operand.hbm [shape: f32[16,128], index: 1, kind: input, shape index: {}]
  %s2 = inlined_call_operand.hbm [shape: f32[8,128], index: 2, kind: output, shape index: {}]
  %s3 = sld [smem:[#allocation0]]
  $region30: #{tpu_custom_call.1} parent=0
    _
  %s5 = ssub.s32 1, %s3
  %s6 = scalar_select 0, %s5, %s3
  $region1: #{tpu_custom_call.1} parent=0
    #allocation2 [shape = 'u8[8192]{0}', space=vmem, size = 0x2000, scoped, tag = 'input window, operand 0, single buffered']
    #allocation3 [shape = 's32[1]{0}', space=sflag, size = 0x4, scoped, tag = 'scoped memory for tpu_custom_call.1']
    #allocation4 [shape = 's32[1]{0}', space=sflag, size = 0x4, scoped, tag = 'scoped memory for tpu_custom_call.1']
    #allocation5 [shape = 'u8[8192]{0}', space=vmem, size = 0x2000, scoped, tag = 'input window, operand 1, single buffered']
    #allocation6 [shape = 's32[1]{0}', space=sflag, size = 0x4, scoped, tag = 'scoped memory for tpu_custom_call.1']
    #allocation7 [shape = 'u8[4096]{0}', space=vmem, size = 0x1000, scoped, tag = 'output window, operand 0, single buffered']
    %7 = vsyncpa [#allocation3], 0
    %8 = vsyncpa [#allocation6], 0
    %9 = vsyncpa [#allocation4], 0
    // Predicated region
    $region2: #{tpu_custom_call.1} parent=1 // pred_check
      _
    $region3: #{tpu_custom_call.1} parent=1 // pred_check_branch
      %11 = sbr.rel (0) target = $region5
    $region4: #{tpu_custom_call.1} parent=1 // pred_region
      %s13 = ssub.s32 256, 256
      %14 = vsyncadd [#allocation3], %s13
      %s15 = sshll.u32 [#allocation2], 4
      %s16 = int_to_ptr.vmem [resolvable:$true] %s15
      %21 = dma.hbm_to_vmem [thread:$0]  %s0, 256, %s16, [#allocation3], 128, 128, 8
    $region5: #{tpu_custom_call.1} parent=1 // pred_fallthru
      _
    // Predicated region
    $region6: #{tpu_custom_call.1} parent=1 // pred_check
      _
    $region7: #{tpu_custom_call.1} parent=1 // pred_check_branch
      %23 = sbr.rel (0) target = $region9
    $region8: #{tpu_custom_call.1} parent=1 // pred_region
      %s25 = ssub.s32 256, 256
      %26 = vsyncadd [#allocation6], %s25
      %s27 = sshll.u32 [#allocation5], 4
      %s28 = int_to_ptr.vmem [resolvable:$true] %s27
      %33 = dma.hbm_to_vmem [thread:$0]  %s1, 256, %s28, [#allocation6], 128, 128, 8
    $region9: #{tpu_custom_call.1} parent=1 // pred_fallthru
      _
    // Predicated region
    $region10: #{tpu_custom_call.1} parent=1 // pred_check
      _
    $region11: #{tpu_custom_call.1} parent=1 // pred_check_branch
      %35 = sbr.rel (0) target = $region13
    $region12: #{tpu_custom_call.1} parent=1 // pred_region
      %36 = dma.done [#allocation3], 256
    $region13: #{tpu_custom_call.1} parent=1 // pred_fallthru
      _
    // Predicated region
    $region14: #{tpu_custom_call.1} parent=1 // pred_check
      _
    $region15: #{tpu_custom_call.1} parent=1 // pred_check_branch
      %38 = sbr.rel (0) target = $region17
    $region16: #{tpu_custom_call.1} parent=1 // pred_region
      %39 = dma.done [#allocation6], 256
    $region17: #{tpu_custom_call.1} parent=1 // pred_fallthru
      _
    %p40 = scmp.eq.s32.totalorder 0, 0
    // Predicated region
    $region18: #{tpu_custom_call.1} parent=1 // pred_check
      %p41 = pneg %p40
    $region19: #{tpu_custom_call.1} parent=1 // pred_check_branch
      %43 = sbr.rel (%p41) target = $region21
    $region20: #{tpu_custom_call.1} parent=1 // pred_region
      %44 = vst [vmem:[#allocation7] sm:$0xff] 0.0
    $region21: #{tpu_custom_call.1} parent=1 // pred_fallthru
      _
    %v45 = vld [vmem:[#allocation2] sm:$0xff]
    %v46 = vld [vmem:[#allocation2 + $0x8] sm:$0xff]
    %v47 = vld [vmem:[#allocation5] sm:$0xff]
    %v48 = vld [vmem:[#allocation5 + $0x8] sm:$0xff]
    %v49 = vmax.f32 %v45, 0.0
    %v50 = vmax.f32 %v46, 0.0
    %v51 = vmul.f32 %v45, %v47
    %v52 = vmul.f32 %v46, %v48
    %v53 = vsub.f32 %v49, %v51
    %v54 = vsub.f32 %v50, %v52
    %v55 = vand.u32 2147483647, %v45
    %v56 = vand.u32 2147483647, %v46
    %v57 = vsub.f32 0.0, %v55
    %v58 = vsub.f32 0.0, %v56
    %v59 = vmul.f32 %v57, 1.442695
    %v60 = vpow.pop %v59
    %v61 = vmul.f32 %v58, 1.442695
    %v62 = vpow.pop %v61
    %v63 = vadd.f32 %v60, 1.0
    %v64 = vlog2.pop %v63
    %v65 = vmul.f32 %v64, 0.6931472
    %v66 = vmul.f32 -0.5, %v60
    %v67 = vadd.f32 %v66, 1.0
    %v68 = vmul.f32 %v67, %v60
    %v69 = vand.u32 2147483647, %v60
    %vm70 = vcmp.lt.f32.partialorder %v69, 0.0004427343
    %v71 = vsel %vm70, %v68, %v65
    %v72 = vadd.f32 %v62, 1.0
    %v73 = vlog2.pop %v72
    %v74 = vmul.f32 %v73, 0.6931472
    %v75 = vmul.f32 -0.5, %v62
    %v76 = vadd.f32 %v75, 1.0
    %v77 = vmul.f32 %v76, %v62
    %v78 = vand.u32 2147483647, %v62
    %vm79 = vcmp.lt.f32.partialorder %v78, 0.0004427343
    %v80 = vsel %vm79, %v77, %v74
    %v81 = vadd.f32 %v53, %v71
    %v82 = vadd.f32 %v54, %v80
    %v83 = vsub.f32 0.0, %v81
    %v84 = vsub.f32 0.0, %v82
    %v85 = vmul.f32 %v83, 1.442695
    %v86 = vpow.pop %v85
    %v87 = vmul.f32 %v84, 1.442695
    %v88 = vpow.pop %v87
    %v89 = vsub.f32 1.0, %v86
    %v90 = vsub.f32 1.0, %v88
    %v91 = vmul.f32 %v89, %v89
    %v92 = vmul.f32 %v90, %v90
    %v93 = vmul.f32 %v91, %v81
    %v94 = vmul.f32 %v92, %v82
    %v95 = vld [vmem:[#allocation7] sm:$0xff]
    %v96 = vadd.f32 %v93, %v94
    %v97 = vadd.f32 %v95, %v96
    %98 = vst [vmem:[#allocation7] sm:$0xff] %v97
    // Predicated region
    $region22: #{tpu_custom_call.1} parent=1 // pred_check
      _
    $region23: #{tpu_custom_call.1} parent=1 // pred_check_branch
      %100 = sbr.rel (0) target = $region25
    $region24: #{tpu_custom_call.1} parent=1 // pred_region
      %s102 = ssub.s32 128, 128
      %103 = vsyncadd [#allocation4], %s102
      %s105 = sshll.u32 [#allocation7], 4
      %s106 = int_to_ptr.vmem [resolvable:$true] %s105
      %108 = dma.vmem_to_hbm [thread:$0]  %s106, 128, %s2, [#allocation4]
    $region25: #{tpu_custom_call.1} parent=1 // pred_fallthru
      _
    // Predicated region
    $region26: #{tpu_custom_call.1} parent=1 // pred_check
      _
    $region27: #{tpu_custom_call.1} parent=1 // pred_check_branch
      %110 = sbr.rel (0) target = $region29
    $region28: #{tpu_custom_call.1} parent=1 // pred_region
      %111 = dma.done [#allocation4], 128
    $region29: #{tpu_custom_call.1} parent=1 // pred_fallthru
      _
    %112 = vsyncpa [#allocation3], 1
    %113 = vsyncpa [#allocation6], 1
    %114 = vsyncpa [#allocation4], 1

</llo_original>
